<compile_context>
chip_gen: v7x
topology: tpu7x:2x2x1
jax: 0.10.0
libtpu: 0.0.40
codegen_flags: <defaults>
</compile_context>

<pallas_src>
import numpy as np
import jax
import jax.numpy as jnp
from jax.experimental import pallas as pl
from jax.experimental.pallas import tpu as pltpu


SUBLANE = 8
TM_TARGET = 1024                 # rows per grid step (target)
VMEM_LIMIT = 48 * 1024 * 1024    # <= v7x's 64 MiB physical VMEM, with headroom


def _round_up(n, m):
    return (n + m - 1) // m * m


def _pick_tile(m, tm_target=TM_TARGET):
    """Row tile (multiple of 8) and padded row count; prefer >=2 grid steps."""
    if m >= 2 * tm_target:
        tm = tm_target
    elif m >= 2 * SUBLANE:
        tm = _round_up(-(-m // 2), SUBLANE)        # ~half the rows -> 2 steps
    else:
        tm = _round_up(max(m, 1), SUBLANE)
    return tm, _round_up(m, tm)


# ----------------------------- Pallas kernel ------------------------------- #

def _feed_forward_kernel(x_ref, w1t_ref, b1_ref, w2t_ref, b2_ref, out_ref):
    """out = relu(x @ w1t + b1) @ w2t + b2.

    x    : (tm, dim)          f32
    w1t  : (dim, hidden)      bf16   (resident)
    b1   : (1, hidden)        f32    (resident)
    w2t  : (hidden, out_dim)  bf16   (resident)
    b2   : (1, out_dim)       f32    (resident)
    out  : (tm, out_dim)      f32
    """
    h = jnp.dot(x_ref[...].astype(jnp.bfloat16), w1t_ref[...],
                preferred_element_type=jnp.float32) + b1_ref[...]
    h = jnp.maximum(h, 0.0)    # ReLU
    # TODO(synk): nn.Dropout with p>0 (training) not implemented; p=0 default
    # is the identity, so it is omitted.
    y = jnp.dot(h.astype(jnp.bfloat16), w2t_ref[...],
                preferred_element_type=jnp.float32) + b2_ref[...]
    out_ref[...] = y


# ------------------------------ JAX wrapper -------------------------------- #

def make_feed_forward_fn(params, tm_target=TM_TARGET):
    """Prepares (transposes / casts) weights ONCE and returns a jitted fwd."""
    w1, b1 = params["w1"], params["b1"]       # (hidden, dim), (hidden,)
    w2, b2 = params["w2"], params["b2"]       # (out_dim, hidden), (out_dim,)
    hidden, dim = w1.shape
    out_dim = w2.shape[0]

    w1t = jnp.asarray(w1, jnp.float32).T.astype(jnp.bfloat16)    # (dim, hidden)
    w2t = jnp.asarray(w2, jnp.float32).T.astype(jnp.bfloat16)    # (hidden, out_dim)
    b1r = jnp.asarray(b1, jnp.float32).reshape(1, hidden)
    b2r = jnp.asarray(b2, jnp.float32).reshape(1, out_dim)

    compiler_params = pltpu.CompilerParams(
        dimension_semantics=("parallel",),
        vmem_limit_bytes=VMEM_LIMIT)

    @jax.jit
    def forward(x):
        lead = x.shape[:-1]
        assert x.shape[-1] == dim
        m = 1
        for s in lead:
            m *= int(s)
        x2d = x.reshape(m, dim).astype(jnp.float32)

        tm, m_pad = _pick_tile(m, tm_target)
        if m_pad != m:
            # Padded rows produce garbage-but-finite values (bias/relu only);
            # they are sliced off below -- do not remove the [:m] slice.
            x2d = jnp.pad(x2d, ((0, m_pad - m), (0, 0)))

        out = pl.pallas_call(
            _feed_forward_kernel,
            out_shape=jax.ShapeDtypeStruct((m_pad, out_dim), jnp.float32),
            grid_spec=pltpu.PrefetchScalarGridSpec(
                num_scalar_prefetch=0,
                grid=(m_pad // tm,),
                in_specs=[
                    pl.BlockSpec((tm, dim), lambda i: (i, 0)),
                    pl.BlockSpec((dim, hidden), lambda i: (0, 0)),      # resident
                    pl.BlockSpec((1, hidden), lambda i: (0, 0)),        # resident
                    pl.BlockSpec((hidden, out_dim), lambda i: (0, 0)),  # resident
                    pl.BlockSpec((1, out_dim), lambda i: (0, 0)),       # resident
                ],
                out_specs=pl.BlockSpec((tm, out_dim), lambda i: (i, 0)),
            ),
            compiler_params=compiler_params,
            cost_estimate=pl.CostEstimate(
                flops=2 * m_pad * hidden * (dim + out_dim),
                transcendentals=0,
                bytes_accessed=(m_pad * (dim + out_dim) * 4
                                + (dim + out_dim) * hidden * 2
                                + (hidden + out_dim) * 4)),
        )(x2d, w1t, b1r, w2t, b2r)

        return out[:m].reshape(*lead, out_dim)

    return forward


# ------------------------- pure-JAX reference ------------------------------ #

def feed_forward_reference(x, params):
    x = x.astype(jnp.float32)
    h = jnp.maximum(x @ params["w1"].T + params["b1"], 0.0)
    return h @ params["w2"].T + params["b2"]


def init_params(key, dim, hidden_dim, out_dim=None):
    if out_dim is None:
        out_dim = dim
    ks = jax.random.split(key, 4)
    return {
        "w1": 0.1 * jax.random.normal(ks[0], (hidden_dim, dim), jnp.float32),
        "b1": 0.1 * jax.random.normal(ks[1], (hidden_dim,), jnp.float32),
        "w2": 0.1 * jax.random.normal(ks[2], (out_dim, hidden_dim), jnp.float32),
        "b2": 0.1 * jax.random.normal(ks[3], (out_dim,), jnp.float32),
    }


# --------------------------------- main ------------------------------------ #

if __name__ == "__main__":
    # Small shapes consistent with the module: x is (batch, seq, dim).
    B, N, dim, hidden = 2, 8, 16, 32

    key = jax.random.PRNGKey(0)
    kx, kp = jax.random.split(key)
    x = jax.random.normal(kx, (B, N, dim), jnp.float32)
    params = init_params(kp, dim, hidden)

    feed_forward = make_feed_forward_fn(params)
    out = jax.block_until_ready(feed_forward(x))

    ref = feed_forward_reference(x, params)
    # Matmul operands are bf16 (f32 accumulation), so allow bf16-level error.
    np.testing.assert_allclose(np.asarray(out), np.asarray(ref),
                               rtol=2e-2, atol=1e-2)

    print("KERNEL_OK")
</pallas_src>

<mosaic_0001>
module attributes {stable_mosaic.version = 11 : i64} {
  func.func @_feed_forward_kernel(%arg0: i32, %arg1: memref<8x16xf32, #tpu.memory_space<vmem>>, %arg2: memref<16x32xbf16, #tpu.memory_space<vmem>>, %arg3: memref<1x32xf32, #tpu.memory_space<vmem>>, %arg4: memref<32x16xbf16, #tpu.memory_space<vmem>>, %arg5: memref<1x16xf32, #tpu.memory_space<vmem>>, %arg6: memref<8x16xf32, #tpu.memory_space<vmem>>) attributes {dimension_semantics = [#tpu.dimension_semantics<parallel>], iteration_bounds = array<i64: 2>, scalar_prefetch = 0 : i64, scratch_operands = 0 : i64, tpu.core_type = #tpu.core_type<tc>, window_params = [{transform_indices = @transform_0, window_bounds = array<i64: 8, 16>}, {pipeline_mode = #tpu.pipeline_mode<synchronous>, transform_indices = @transform_1, window_bounds = array<i64: 16, 32>}, {pipeline_mode = #tpu.pipeline_mode<synchronous>, transform_indices = @transform_2, window_bounds = array<i64: 1, 32>}, {pipeline_mode = #tpu.pipeline_mode<synchronous>, transform_indices = @transform_3, window_bounds = array<i64: 32, 16>}, {pipeline_mode = #tpu.pipeline_mode<synchronous>, transform_indices = @transform_4, window_bounds = array<i64: 1, 16>}, {transform_indices = @transform_5, window_bounds = array<i64: 8, 16>}]} {
    %c0 = arith.constant 0 : index
    %c0_0 = arith.constant 0 : index
    %0 = vector.load %arg1[%c0, %c0_0] : memref<8x16xf32, #tpu.memory_space<vmem>>, vector<8x16xf32>
    %1 = arith.truncf %0 : vector<8x16xf32> to vector<8x16xbf16>
    %c0_1 = arith.constant 0 : index
    %c0_2 = arith.constant 0 : index
    %2 = vector.load %arg2[%c0_1, %c0_2] : memref<16x32xbf16, #tpu.memory_space<vmem>>, vector<16x32xbf16>
    %cst = arith.constant dense<0.000000e+00> : vector<8x32xf32>
    %3 = tpu.matmul %1, %2, %cst {dimension_numbers = #tpu.dot_dimension_numbers<[1], [0], [0], [1], [0, 0, 1, 1], [], []>} : vector<8x16xbf16>, vector<16x32xbf16>, vector<8x32xf32> -> vector<8x32xf32>
    %c0_3 = arith.constant 0 : index
    %c0_4 = arith.constant 0 : index
    %4 = vector.load %arg3[%c0_3, %c0_4] : memref<1x32xf32, #tpu.memory_space<vmem>>, vector<1x32xf32>
    %5 = vector.broadcast %4 : vector<1x32xf32> to vector<8x32xf32>
    %6 = arith.addf %3, %5 : vector<8x32xf32>
    %cst_5 = arith.constant 0.000000e+00 : f32
    %7 = vector.broadcast %cst_5 : f32 to vector<8x32xf32>
    %8 = arith.maximumf %6, %7 : vector<8x32xf32>
    %9 = arith.truncf %8 : vector<8x32xf32> to vector<8x32xbf16>
    %c0_6 = arith.constant 0 : index
    %c0_7 = arith.constant 0 : index
    %10 = vector.load %arg4[%c0_6, %c0_7] : memref<32x16xbf16, #tpu.memory_space<vmem>>, vector<32x16xbf16>
    %cst_8 = arith.constant dense<0.000000e+00> : vector<8x16xf32>
    %11 = tpu.matmul %9, %10, %cst_8 {dimension_numbers = #tpu.dot_dimension_numbers<[1], [0], [0], [1], [0, 0, 1, 1], [], []>} : vector<8x32xbf16>, vector<32x16xbf16>, vector<8x16xf32> -> vector<8x16xf32>
    %c0_9 = arith.constant 0 : index
    %c0_10 = arith.constant 0 : index
    %12 = vector.load %arg5[%c0_9, %c0_10] : memref<1x16xf32, #tpu.memory_space<vmem>>, vector<1x16xf32>
    %13 = vector.broadcast %12 : vector<1x16xf32> to vector<8x16xf32>
    %14 = arith.addf %11, %13 : vector<8x16xf32>
    %c0_11 = arith.constant 0 : index
    %c0_12 = arith.constant 0 : index
    %15 = vector.load %arg6[%c0_11, %c0_12] : memref<8x16xf32, #tpu.memory_space<vmem>>, vector<8x16xf32>
    tpu.vector_store %arg6[%c0_11, %c0_12], %14 {strides = array<i32>} : memref<8x16xf32, #tpu.memory_space<vmem>>, vector<8x16xf32>,
    return
  }
  func.func @transform_0(%arg0: i32) -> (i32, i32) {
    %c0_i32 = arith.constant 0 : i32
    %c0_i32_0 = arith.constant 0 : i32
    return %arg0, %c0_i32 : i32, i32
  }
  func.func @transform_1(%arg0: i32) -> (i32, i32) {
    %c0_i32 = arith.constant 0 : i32
    %c0_i32_0 = arith.constant 0 : i32
    %c0_i32_1 = arith.constant 0 : i32
    return %c0_i32, %c0_i32_0 : i32, i32
  }
  func.func @transform_2(%arg0: i32) -> (i32, i32) {
    %c0_i32 = arith.constant 0 : i32
    %c0_i32_0 = arith.constant 0 : i32
    %c0_i32_1 = arith.constant 0 : i32
    return %c0_i32, %c0_i32_0 : i32, i32
  }
  func.func @transform_3(%arg0: i32) -> (i32, i32) {
    %c0_i32 = arith.constant 0 : i32
    %c0_i32_0 = arith.constant 0 : i32
    %c0_i32_1 = arith.constant 0 : i32
    return %c0_i32, %c0_i32_0 : i32, i32
  }
  func.func @transform_4(%arg0: i32) -> (i32, i32) {
    %c0_i32 = arith.constant 0 : i32
    %c0_i32_0 = arith.constant 0 : i32
    %c0_i32_1 = arith.constant 0 : i32
    return %c0_i32, %c0_i32_0 : i32, i32
  }
  func.func @transform_5(%arg0: i32) -> (i32, i32) {
    %c0_i32 = arith.constant 0 : i32
    %c0_i32_0 = arith.constant 0 : i32
    return %arg0, %c0_i32 : i32, i32
  }
}

</mosaic_0001>

<llo_original>
// kernel: forward.1
$region0: #{forward.1}
  #allocation0 [shape = 'u32[]', space=smem, size = 0x4, offset = 0x4, fixed_abs, tag = 'smem constant byte address 0x4 - core index']
  #allocation1 [shape = 'u32[144,128]{1,0:T(1,128)}', space=vmem, size = 0x12000, scoped, tag = 'internal scratch']
  %s0 = inlined_call_operand.hbm [shape: f32[16,16], index: 0, kind: input, shape index: {}]
  %s1 = inlined_call_operand.vmem [shape: bf16[16,32], index: 1, kind: input, shape index: {}]
  %s2 = inlined_call_operand.vmem [shape: f32[1,32], index: 2, kind: input, shape index: {}]
  %s3 = inlined_call_operand.vmem [shape: bf16[32,16], index: 3, kind: input, shape index: {}]
  %s4 = inlined_call_operand.vmem [shape: f32[1,16], index: 4, kind: input, shape index: {}]
  %s5 = inlined_call_operand.hbm [shape: f32[16,16], index: 5, kind: output, shape index: {}]
  %s6 = sld [smem:[#allocation0]]
  $region57: #{forward.1} parent=0
    _
  %s8 = ssub.s32 1, %s6
  %s9 = scalar_select 0, %s8, %s6
  $region1: #{forward.1} parent=0
    #allocation2 [shape = 'u8[8192]{0}', space=vmem, size = 0x2000, scoped, tag = 'input window, operand 0']
    #allocation3 [shape = 's32[2]{0}', space=sflag, size = 0x8, scoped, tag = 'scoped memory for forward.1']
    #allocation4 [shape = 's32[2]{0}', space=sflag, size = 0x8, scoped, tag = 'scoped memory for forward.1']
    #allocation5 [shape = 'u8[8192]{0}', space=vmem, size = 0x2000, scoped, tag = 'output window, operand 0']
    %10 = vsyncpa [#allocation3], 0
    %s11 = scalar_lea.sflag [#allocation3], 1
    %12 = vsyncpa %s11, 0
    %13 = vsyncpa [#allocation4], 0
    %s14 = scalar_lea.sflag [#allocation4], 1
    %15 = vsyncpa %s14, 0
    loop: start=0, step=1, limit=4
    $region2: #{forward.1} parent=1 // loop_pre_header
      _
    $region3: #{forward.1} parent=1 // loop_header
      %s17 = sphi 0, %s21
      %p18 = scmp.ge.s32.totalorder %s17, 4
      %s27 = sphi 0, %s29
      %s30 = sphi 0, %s27
      %s31 = sphi 0, %s30
      %s47 = sphi 0, %s31
      %s51 = sphi 0, %s51
      %s53 = sphi 0, %s51
      %s54 = sphi 0, %s53
      %s68 = sphi 0, %s54
      %s72 = sphi 0, %s72
      %s74 = sphi 0, %s72
      %s75 = sphi 0, %s74
      %s89 = sphi 0, %s75
      %s93 = sphi 0, %s93
      %s95 = sphi 0, %s93
      %s96 = sphi 0, %s95
      %s110 = sphi 0, %s96
      %s114 = sphi 0, %s114
      %s116 = sphi 0, %s114
      %s117 = sphi 0, %s116
      %s131 = sphi 0, %s117
      %s137 = sphi 0, %s139
      %s140 = sphi 0, %s137
      %s141 = sphi 0, %s140
      %s157 = sphi 0, %s141
    $region4: #{forward.1} parent=1 // loop_header_branch
      %20 = sbr.rel (%p18) target = $region8
    $region5: #{forward.1} parent=1 // loop_body
      %s22 = ssub.s32 %s17, 1
      %s23 = ssub.s32 %s17, 2
      %s24 = sadd.s32 %s17, 1
      %s25 = ssub.s32 %s17, %s24
      %p26 = scmp.eq.s32.totalorder %s25, 0
      %s28 = sadd.s32 %s27, 1
      %s29 = scalar_select %p26, %s27, %s28
      %p32 = pneg %p26
      %p33 = scmp.eq.s32.totalorder %s17, 1
      %p34 = por %p32, %p33
      %p35 = scmp.ne.s32.totalorder %s27, %s30
      %p36 = scmp.eq.s32.totalorder %s17, 0
      %p37 = por %p35, %p36
      %p38 = scmp.ne.s32.totalorder %s27, %s30
      %p39 = scmp.eq.s32.totalorder %s22, 1
      %p40 = por %p38, %p39
      %p41 = scmp.ne.s32.totalorder %s30, %s31
      %p42 = scmp.eq.s32.totalorder %s22, 0
      %p43 = por %p41, %p42
      %p44 = scmp.ne.s32.totalorder %s30, %s31
      %p45 = scmp.eq.s32.totalorder %s23, 1
      %p46 = por %p44, %p45
      %p48 = scmp.ne.s32.totalorder %s31, %s47
      %p49 = scmp.eq.s32.totalorder %s23, 0
      %p50 = por %p48, %p49
      %s52 = sadd.s32 %s51, 1
      %p55 = scmp.eq.s32.totalorder %s17, 1
      %p56 = scmp.ne.s32.totalorder %s51, %s53
      %p57 = scmp.eq.s32.totalorder %s17, 0
      %p58 = por %p56, %p57
      %p59 = scmp.ne.s32.totalorder %s51, %s53
      %p60 = scmp.eq.s32.totalorder %s22, 1
      %p61 = por %p59, %p60
      %p62 = scmp.ne.s32.totalorder %s53, %s54
      %p63 = scmp.eq.s32.totalorder %s22, 0
      %p64 = por %p62, %p63
      %p65 = scmp.ne.s32.totalorder %s53, %s54
      %p66 = scmp.eq.s32.totalorder %s23, 1
      %p67 = por %p65, %p66
      %p69 = scmp.ne.s32.totalorder %s54, %s68
      %p70 = scmp.eq.s32.totalorder %s23, 0
      %p71 = por %p69, %p70
      %s73 = sadd.s32 %s72, 1
      %p76 = scmp.eq.s32.totalorder %s17, 1
      %p77 = scmp.ne.s32.totalorder %s72, %s74
      %p78 = scmp.eq.s32.totalorder %s17, 0
      %p79 = por %p77, %p78
      %p80 = scmp.ne.s32.totalorder %s72, %s74
      %p81 = scmp.eq.s32.totalorder %s22, 1
      %p82 = por %p80, %p81
      %p83 = scmp.ne.s32.totalorder %s74, %s75
      %p84 = scmp.eq.s32.totalorder %s22, 0
      %p85 = por %p83, %p84
      %p86 = scmp.ne.s32.totalorder %s74, %s75
      %p87 = scmp.eq.s32.totalorder %s23, 1
      %p88 = por %p86, %p87
      %p90 = scmp.ne.s32.totalorder %s75, %s89
      %p91 = scmp.eq.s32.totalorder %s23, 0
      %p92 = por %p90, %p91
      %s94 = sadd.s32 %s93, 1
      %p97 = scmp.eq.s32.totalorder %s17, 1
      %p98 = scmp.ne.s32.totalorder %s93, %s95
      %p99 = scmp.eq.s32.totalorder %s17, 0
      %p100 = por %p98, %p99
      %p101 = scmp.ne.s32.totalorder %s93, %s95
      %p102 = scmp.eq.s32.totalorder %s22, 1
      %p103 = por %p101, %p102
      %p104 = scmp.ne.s32.totalorder %s95, %s96
      %p105 = scmp.eq.s32.totalorder %s22, 0
      %p106 = por %p104, %p105
      %p107 = scmp.ne.s32.totalorder %s95, %s96
      %p108 = scmp.eq.s32.totalorder %s23, 1
      %p109 = por %p107, %p108
      %p111 = scmp.ne.s32.totalorder %s96, %s110
      %p112 = scmp.eq.s32.totalorder %s23, 0
      %p113 = por %p111, %p112
      %s115 = sadd.s32 %s114, 1
      %p118 = scmp.eq.s32.totalorder %s17, 1
      %p119 = scmp.ne.s32.totalorder %s114, %s116
      %p120 = scmp.eq.s32.totalorder %s17, 0
      %p121 = por %p119, %p120
      %p122 = scmp.ne.s32.totalorder %s114, %s116
      %p123 = scmp.eq.s32.totalorder %s22, 1
      %p124 = por %p122, %p123
      %p125 = scmp.ne.s32.totalorder %s116, %s117
      %p126 = scmp.eq.s32.totalorder %s22, 0
      %p127 = por %p125, %p126
      %p128 = scmp.ne.s32.totalorder %s116, %s117
      %p129 = scmp.eq.s32.totalorder %s23, 1
      %p130 = por %p128, %p129
      %p132 = scmp.ne.s32.totalorder %s117, %s131
      %p133 = scmp.eq.s32.totalorder %s23, 0
      %p134 = por %p132, %p133
      %s135 = ssub.s32 %s17, %s24
      %p136 = scmp.eq.s32.totalorder %s135, 0
      %s138 = sadd.s32 %s137, 1
      %s139 = scalar_select %p136, %s137, %s138
      %p142 = pneg %p136
      %p143 = scmp.eq.s32.totalorder %s17, 1
      %p144 = por %p142, %p143
      %p145 = scmp.ne.s32.totalorder %s137, %s140
      %p146 = scmp.eq.s32.totalorder %s17, 0
      %p147 = por %p145, %p146
      %p148 = scmp.ne.s32.totalorder %s137, %s140
      %p149 = scmp.eq.s32.totalorder %s22, 1
      %p150 = por %p148, %p149
      %p151 = scmp.ne.s32.totalorder %s140, %s141
      %p152 = scmp.eq.s32.totalorder %s22, 0
      %p153 = por %p151, %p152
      %p154 = scmp.ne.s32.totalorder %s140, %s141
      %p155 = scmp.eq.s32.totalorder %s23, 1
      %p156 = por %p154, %p155
      %p158 = scmp.ne.s32.totalorder %s141, %s157
      %p159 = scmp.eq.s32.totalorder %s23, 0
      %p160 = por %p158, %p159
      %p161 = scmp.le.s32.totalorder 1, %s17
      %p162 = scmp.lt.s32.totalorder %s17, 3
      %p163 = pnand %p161, %p162
      %p164 = pneg %p163
      // Predicated region
      $region9: #{forward.1} parent=5 // pred_check
        _
      $region10: #{forward.1} parent=5 // pred_check_branch
        %166 = sbr.rel (%p163) target = $region12
      $region11: #{forward.1} parent=5 // pred_region
        %s167 = ssub.s32 %s17, 1
        // Predicated region
        $region13: #{forward.1} parent=11 // pred_check
          %p168 = pneg %p64
        $region14: #{forward.1} parent=11 // pred_check_branch
          %170 = sbr.rel (%p168) target = $region16
        $region15: #{forward.1} parent=11 // pred_region
          _
        $region16: #{forward.1} parent=11 // pred_fallthru
          _
        // Predicated region
        $region17: #{forward.1} parent=11 // pred_check
          %p171 = pneg %p85
        $region18: #{forward.1} parent=11 // pred_check_branch
          %173 = sbr.rel (%p171) target = $region20
        $region19: #{forward.1} parent=11 // pred_region
          _
        $region20: #{forward.1} parent=11 // pred_fallthru
          _
        // Predicated region
        $region21: #{forward.1} parent=11 // pred_check
          %p174 = pneg %p106
        $region22: #{forward.1} parent=11 // pred_check_branch
          %176 = sbr.rel (%p174) target = $region24
        $region23: #{forward.1} parent=11 // pred_region
          _
        $region24: #{forward.1} parent=11 // pred_fallthru
          _
        // Predicated region
        $region25: #{forward.1} parent=11 // pred_check
          %p177 = pneg %p127
        $region26: #{forward.1} parent=11 // pred_check_branch
          %179 = sbr.rel (%p177) target = $region28
        $region27: #{forward.1} parent=11 // pred_region
          _
        $region28: #{forward.1} parent=11 // pred_fallthru
          _
      $region12: #{forward.1} parent=5 // pred_fallthru
        _
      %p180 = scmp.lt.s32.totalorder %s17, 2
      // Predicated region
      $region29: #{forward.1} parent=5 // pred_check
        %p181 = pneg %p180
      $region30: #{forward.1} parent=5 // pred_check_branch
        %183 = sbr.rel (%p181) target = $region32
      $region31: #{forward.1} parent=5 // pred_region
        // Predicated region
        $region33: #{forward.1} parent=31 // pred_check
          %p184 = pneg %p37
        $region34: #{forward.1} parent=31 // pred_check_branch
          %186 = sbr.rel (%p184) target = $region36
        $region35: #{forward.1} parent=31 // pred_region
          %s187 = sand.u32 %s27, 1
          %s188 = scalar_lea.sflag [#allocation3], %s187
          %s189 = sand.u32 %s27, 1
          %s190 = smul.addr %s189, 8
          %s191 = scalar_lea.vmem [#allocation2], %s190
          %s193 = ssub.s32 128, 128
          %194 = vsyncadd %s188, %s193
          %s195 = smul.addr %s17, 128
          %s196 = scalar_lea.hbm %s0, %s195
          %s198 = sshll.u32 %s191, 4
          %s199 = int_to_ptr.vmem [resolvable:$true] %s198
          %201 = dma.hbm_to_vmem [thread:$0]  %s196, 128, %s199, %s188
        $region36: #{forward.1} parent=31 // pred_fallthru
          _
      $region32: #{forward.1} parent=5 // pred_fallthru
        _
      %p202 = scmp.le.s32.totalorder 1, %s17
      %p203 = scmp.lt.s32.totalorder %s17, 3
      %p204 = pnand %p202, %p203
      %p205 = pneg %p204
      // Predicated region
      $region37: #{forward.1} parent=5 // pred_check
        _
      $region38: #{forward.1} parent=5 // pred_check_branch
        %207 = sbr.rel (%p204) target = $region40
      $region39: #{forward.1} parent=5 // pred_region
        %s208 = ssub.s32 %s17, 1
        %s209 = sand.u32 %s30, 1
        %s210 = scalar_lea.sflag [#allocation3], %s209
        %s211 = sand.u32 %s30, 1
        %s212 = smul.addr %s211, 8
        %s213 = scalar_lea.vmem [#allocation2], %s212
        // Predicated region
        $region41: #{forward.1} parent=39 // pred_check
          %p214 = pneg %p43
        $region42: #{forward.1} parent=39 // pred_check_branch
          %216 = sbr.rel (%p214) target = $region44
        $region43: #{forward.1} parent=39 // pred_region
          %217 = dma.done %s210, 128
        $region44: #{forward.1} parent=39 // pred_fallthru
          _
        %s218 = sand.u32 %s30, 1
        %s219 = scalar_lea.sflag [#allocation3], %s218
        %s220 = sand.u32 %s30, 1
        %s221 = smul.addr %s220, 8
        %s222 = scalar_lea.vmem [#allocation2], %s221
        %p223 = pneg %p43
        %p224 = pneg %p40
        %p225 = pneg %p64
        %p226 = pneg %p61
        %p227 = pneg %p85
        %p228 = pneg %p82
        %p229 = pneg %p106
        %p230 = pneg %p103
        %p231 = pneg %p127
        %p232 = pneg %p124
        %p233 = pneg %p153
        %p234 = pneg %p150
        %s235 = sand.u32 %s140, 1
        %s236 = scalar_lea.sflag [#allocation4], %s235
        %s237 = sand.u32 %s140, 1
        %s238 = smul.addr %s237, 8
        %s239 = scalar_lea.vmem [#allocation5], %s238
        %v241 = vld [vmem:[%s213] sm:$0xff]
        %v242 = vpack.c.bf16 %v241, %v241
        %v243 = vld [vmem:[%s1] sm:$0xf]
        %v244 = vld [vmem:[%s1 + $0x4] sm:$0xf]
        %v245 = vld [vmem:[%s2] sm:$0x1]
        %v247 = vlaneseq
        %v248 = vshrl.u32 %v247, 7
        %v249 = vsub.s32 0, %v248
        %v250 = vrot.slane %v245, %v249
        %v254 = vunpack.c.l.b16 %v243
        %v255 = vunpack.c.l.b16 %v244
        %v256 = vpack.c.b16 %v255, %v254
        %vm258 = vcmask 130048
        %v260 = vsel %vm258, %v242, 0
        %262 = vmatprep.subr.bf16.mxu0 0
        %263 = vmatpush1.bf16.msra.mxu0 %v256
        %264 = vmatprep.subr.bf16.mxu0 0
        %265 = vmatpush1.bf16.msra.mxu0 0
        %266 = vmatprep.subr.bf16.mxu0 0
        %267 = vmatpush1.bf16.msra.mxu0 0
        %268 = vmatprep.subr.bf16.mxu0 0
        %269 = vmatpush1.bf16.msra.mxu0 0
        %270 = vmatprep.subr.bf16.mxu0 0
        %271 = vmatpush1.bf16.msra.mxu0 0
        %272 = vmatprep.subr.bf16.mxu0 0
        %273 = vmatpush1.bf16.msra.mxu0 0
        %274 = vmatprep.subr.bf16.mxu0 0
        %275 = vmatpush1.bf16.msra.mxu0 0
        %276 = vmatprep.subr.bf16.mxu0 0
        %277 = vmatpush1.bf16.msra.mxu0 0
        %278 = vmatprep.subr.bf16.mxu0 0
        %279 = vmatpush1.bf16.msra.mxu0 0
        %280 = vmatprep.subr.bf16.mxu0 0
        %281 = vmatpush1.bf16.msra.mxu0 0
        %282 = vmatprep.subr.bf16.mxu0 0
        %283 = vmatpush1.bf16.msra.mxu0 0
        %284 = vmatprep.subr.bf16.mxu0 0
        %285 = vmatpush1.bf16.msra.mxu0 0
        %286 = vmatprep.subr.bf16.mxu0 0
        %287 = vmatpush1.bf16.msra.mxu0 0
        %288 = vmatprep.subr.bf16.mxu0 0
        %289 = vmatpush1.bf16.msra.mxu0 0
        %290 = vmatprep.subr.bf16.mxu0 0
        %291 = vmatpush1.bf16.msra.mxu0 0
        %292 = vmatprep.subr.bf16.mxu0 0
        %293 = vmatpush1.bf16.msra.mxu0 0
        %294 = vmatprep.mubr.bf16.mxu0 0
        %295 = vmatmul.mubr.bf16.gmra.mrb[0].mxu0 %v260
        %v296 = vpop.f32.mrb[0].mxu0
        %v297 = vadd.f32 %v250, %v296
        %v298 = vpop.f32.mrb[0].mxu0
        %v299 = vpop.f32.mrb[0].mxu0
        %v300 = vpop.f32.mrb[0].mxu0
        %301 = vdwg.mxu0
        %v302 = vmax.f32 %v297, 0.0
        %v303 = vpack.c.bf16 %v302, %v302
        %v304 = vld [vmem:[%s3] sm:$0xf]
        %v305 = vld [vmem:[%s3 + $0x4] sm:$0xf]
        %v306 = vld [vmem:[%s3 + $0x8] sm:$0xf]
        %v307 = vld [vmem:[%s3 + $0xc] sm:$0xf]
        %v308 = vld [vmem:[%s4] sm:$0x1]
        %v310 = vlaneseq
        %v311 = vshrl.u32 %v310, 7
        %v312 = vsub.s32 0, %v311
        %v313 = vrot.slane %v308, %v312
        %v319 = vunpack.c.l.b16 %v304
        %v320 = vunpack.c.l.b16 %v305
        %v321 = vunpack.c.l.b16 %v306
        %v322 = vunpack.c.l.b16 %v307
        %v323 = vpack.c.b16 %v320, %v319
        %v324 = vpack.c.b16 %v322, %v321
        %vm327 = vcmask 261120
        %v329 = vsel %vm327, %v303, 0
        %331 = vmatprep.subr.bf16.mxu0 0
        %332 = vmatpush1.bf16.msra.mxu0 %v323
        %333 = vmatprep.subr.bf16.mxu0 0
        %334 = vmatpush1.bf16.msra.mxu0 %v324
        %335 = vmatprep.subr.bf16.mxu0 0
        %336 = vmatpush1.bf16.msra.mxu0 0
        %337 = vmatprep.subr.bf16.mxu0 0
        %338 = vmatpush1.bf16.msra.mxu0 0
        %339 = vmatprep.subr.bf16.mxu0 0
        %340 = vmatpush1.bf16.msra.mxu0 0
        %341 = vmatprep.subr.bf16.mxu0 0
        %342 = vmatpush1.bf16.msra.mxu0 0
        %343 = vmatprep.subr.bf16.mxu0 0
        %344 = vmatpush1.bf16.msra.mxu0 0
        %345 = vmatprep.subr.bf16.mxu0 0
        %346 = vmatpush1.bf16.msra.mxu0 0
        %347 = vmatprep.subr.bf16.mxu0 0
        %348 = vmatpush1.bf16.msra.mxu0 0
        %349 = vmatprep.subr.bf16.mxu0 0
        %350 = vmatpush1.bf16.msra.mxu0 0
        %351 = vmatprep.subr.bf16.mxu0 0
        %352 = vmatpush1.bf16.msra.mxu0 0
        %353 = vmatprep.subr.bf16.mxu0 0
        %354 = vmatpush1.bf16.msra.mxu0 0
        %355 = vmatprep.subr.bf16.mxu0 0
        %356 = vmatpush1.bf16.msra.mxu0 0
        %357 = vmatprep.subr.bf16.mxu0 0
        %358 = vmatpush1.bf16.msra.mxu0 0
        %359 = vmatprep.subr.bf16.mxu0 0
        %360 = vmatpush1.bf16.msra.mxu0 0
        %361 = vmatprep.subr.bf16.mxu0 0
        %362 = vmatpush1.bf16.msra.mxu0 0
        %363 = vmatprep.mubr.bf16.mxu0 0
        %364 = vmatmul.mubr.bf16.gmra.mrb[0].mxu0 %v329
        %v365 = vpop.f32.mrb[0].mxu0
        %v366 = vadd.f32 %v313, %v365
        %v367 = vpop.f32.mrb[0].mxu0
        %v368 = vpop.f32.mrb[0].mxu0
        %v369 = vpop.f32.mrb[0].mxu0
        %370 = vdwg.mxu0
        %371 = vst.msk [vmem:[%s239] sm:$0xff] %vm258, %v366
        %s372 = sand.u32 %s140, 1
        %s373 = scalar_lea.sflag [#allocation4], %s372
        %s374 = sand.u32 %s140, 1
        %s375 = smul.addr %s374, 8
        %s376 = scalar_lea.vmem [#allocation5], %s375
        // Predicated region
        $region45: #{forward.1} parent=39 // pred_check
          %p377 = pneg %p150
        $region46: #{forward.1} parent=39 // pred_check_branch
          %379 = sbr.rel (%p377) target = $region48
        $region47: #{forward.1} parent=39 // pred_region
          %s381 = ssub.s32 128, 128
          %382 = vsyncadd %s373, %s381
          %s383 = smul.addr %s22, 128
          %s384 = scalar_lea.hbm %s5, %s383
          %s386 = sshll.u32 %s376, 4
          %s387 = int_to_ptr.vmem [resolvable:$true] %s386
          %389 = dma.vmem_to_hbm [thread:$0]  %s387, 128, %s384, %s373
        $region48: #{forward.1} parent=39 // pred_fallthru
          _
      $region40: #{forward.1} parent=5 // pred_fallthru
        _
      %p390 = scmp.le.s32.totalorder 2, %s17
      // Predicated region
      $region49: #{forward.1} parent=5 // pred_check
        %p391 = pneg %p390
      $region50: #{forward.1} parent=5 // pred_check_branch
        %393 = sbr.rel (%p391) target = $region52
      $region51: #{forward.1} parent=5 // pred_region
        %s394 = ssub.s32 %s17, 2
        // Predicated region
        $region53: #{forward.1} parent=51 // pred_check
          %p395 = pneg %p156
        $region54: #{forward.1} parent=51 // pred_check_branch
          %397 = sbr.rel (%p395) target = $region56
        $region55: #{forward.1} parent=51 // pred_region
          %s398 = sand.u32 %s141, 1
          %s399 = scalar_lea.sflag [#allocation4], %s398
          %s400 = sand.u32 %s141, 1
          %s401 = smul.addr %s400, 8
          %s402 = scalar_lea.vmem [#allocation5], %s401
          %403 = dma.done %s399, 128
        $region56: #{forward.1} parent=51 // pred_fallthru
          _
      $region52: #{forward.1} parent=5 // pred_fallthru
        _
    $region6: #{forward.1} parent=1 // loop_footer
      %s21 = sadd.s32 1, %s17
    $region7: #{forward.1} parent=1 // loop_footer_branch
      %16 = sbr.rel target = $region3
    $region8: #{forward.1} parent=1 // loop_exit
      _
    %404 = vsyncpa [#allocation3], 1
    %s405 = scalar_lea.sflag [#allocation3], 1
    %406 = vsyncpa %s405, 1
    %407 = vsyncpa [#allocation4], 1
    %s408 = scalar_lea.sflag [#allocation4], 1
    %409 = vsyncpa %s408, 1

</llo_original>
